<compile_context>
chip_gen: v6e
topology: v6e:2x2x1
jax: 0.10.0
libtpu: 0.0.40
codegen_flags: <defaults>
</compile_context>

<pallas_src>
import jax
import jax.numpy as jnp
from jax.experimental import pallas as pl
from jax.experimental.pallas import tpu as pltpu


def _sigmoid_kernel(x_ref, o_ref):
    """Elementwise sigmoid on one VMEM tile.

    jax.nn.sigmoid lowers to lax.logistic; the transcendental goes to the EUP
    slot and co-issues with the vector loads/stores, so it is effectively free
    in this memory-bound kernel.  Sub-32-bit inputs are upcast to f32 so the
    same code is numerically safe on v5e (no bf16 VPU/EUP); f32 stays as-is.
    """
    x = x_ref[...]
    if x.dtype.itemsize < 4:
        x = x.astype(jnp.float32)
    o_ref[...] = jax.nn.sigmoid(x).astype(o_ref.dtype)


def _slab_layout(n: int):
    """Pick a lane-dense 2D (rows, cols, pad) layout for n elements.

    Prefers a wide last dim (unmasked vst, big DMA bursts) with zero padding;
    only falls back to padding up to a multiple of 8*128 when n is not a
    multiple of 128.
    """
    for cols in (2048, 1024, 512, 256, 128):
        if n % cols == 0:
            return n // cols, cols, 0
    cols = 128
    n_pad = pl.cdiv(n, 8 * cols) * (8 * cols)
    return n_pad // cols, cols, n_pad - n


def sigmoid_pallas(x: jax.Array) -> jax.Array:
    """Applies sigmoid elementwise via a Pallas TPU kernel. Works on any shape."""
    orig_shape = x.shape
    dtype = x.dtype
    n = x.size

    rows, cols, pad = _slab_layout(n)
    x_flat = jnp.ravel(x)
    if pad:
        # Rare fallback (n not a multiple of 128): one extra pad/slice pass.
        x_flat = jnp.pad(x_flat, (0, pad))
    x2d = x_flat.reshape(rows, cols)

    # ~4 MiB blocks: 1 input + 1 output, each double-buffered -> ~16 MiB VMEM,
    # safely under the 32 MiB scoped default on v5e/v6e/v7x, while keeping
    # per-grid-step overhead negligible (measured tilings of this size reach
    # ~85%+ of HBM bandwidth on v6e).
    itemsize = jnp.dtype(dtype).itemsize
    target_block_bytes = 4 * 1024 * 1024
    block_rows = max(8, (target_block_bytes // (cols * itemsize)) // 8 * 8)
    if rows <= block_rows:
        block_rows = rows  # single full-extent block (always a legal block shape)
    grid = (pl.cdiv(rows, block_rows),)

    out2d = pl.pallas_call(
        _sigmoid_kernel,
        out_shape=jax.ShapeDtypeStruct((rows, cols), dtype),
        grid_spec=pltpu.PrefetchScalarGridSpec(
            num_scalar_prefetch=0,
            grid=grid,
            in_specs=[pl.BlockSpec((block_rows, cols), lambda i: (i, 0))],
            out_specs=pl.BlockSpec((block_rows, cols), lambda i: (i, 0)),
        ),
        compiler_params=pltpu.CompilerParams(
            # Single parallel axis -> Mosaic can shard the row blocks across
            # the two TensorCores on v7x; harmless on v5e/v6e.
            dimension_semantics=("parallel",),
        ),
    )(x2d)

    if pad:
        return out2d.reshape(-1)[:n].reshape(orig_shape)
    return out2d.reshape(orig_shape)


if __name__ == "__main__":
    key = jax.random.PRNGKey(0)
    # Small NCHW input consistent with an image-style module.
    x = jax.random.normal(key, (2, 4, 16, 16), dtype=jnp.float32)

    y = sigmoid_pallas(x)
    y = jax.block_until_ready(y)

    # Correctness check against the pure-JAX reference.
    y_ref = jax.nn.sigmoid(x)
    assert y.shape == x.shape and y.dtype == x.dtype
    assert jnp.allclose(y, y_ref, atol=1e-6), "mismatch vs reference sigmoid"

    print("KERNEL_OK")
</pallas_src>

<mosaic_0001>
module attributes {stable_mosaic.version = 11 : i64} {
  func.func @_sigmoid_kernel(%arg0: i32, %arg1: memref<1x2048xf32, #tpu.memory_space<vmem>>, %arg2: memref<1x2048xf32, #tpu.memory_space<vmem>>) attributes {dimension_semantics = [#tpu.dimension_semantics<parallel>], iteration_bounds = array<i64: 1>, scalar_prefetch = 0 : i64, scratch_operands = 0 : i64, tpu.core_type = #tpu.core_type<tc>, window_params = [{transform_indices = @transform_0, window_bounds = array<i64: 1, 2048>}, {transform_indices = @transform_1, window_bounds = array<i64: 1, 2048>}]} {
    %c0 = arith.constant 0 : index
    %c0_0 = arith.constant 0 : index
    %0 = vector.load %arg1[%c0, %c0_0] : memref<1x2048xf32, #tpu.memory_space<vmem>>, vector<1x2048xf32>
    %1 = arith.negf %0 : vector<1x2048xf32>
    %2 = math.exp %1 : vector<1x2048xf32>
    %cst = arith.constant 1.000000e+00 : f32
    %3 = vector.broadcast %cst : f32 to vector<1x2048xf32>
    %4 = arith.addf %3, %2 : vector<1x2048xf32>
    %5 = arith.divf %3, %4 : vector<1x2048xf32>
    %c0_1 = arith.constant 0 : index
    %c0_2 = arith.constant 0 : index
    %6 = vector.load %arg2[%c0_1, %c0_2] : memref<1x2048xf32, #tpu.memory_space<vmem>>, vector<1x2048xf32>
    tpu.vector_store %arg2[%c0_1, %c0_2], %5 {strides = array<i32>} : memref<1x2048xf32, #tpu.memory_space<vmem>>, vector<1x2048xf32>,
    return
  }
  func.func @transform_0(%arg0: i32) -> (i32, i32) {
    %c0_i32 = arith.constant 0 : i32
    %c0_i32_0 = arith.constant 0 : i32
    return %arg0, %c0_i32 : i32, i32
  }
  func.func @transform_1(%arg0: i32) -> (i32, i32) {
    %c0_i32 = arith.constant 0 : i32
    %c0_i32_0 = arith.constant 0 : i32
    return %arg0, %c0_i32 : i32, i32
  }
}

</mosaic_0001>

<llo_original>
// kernel: tpu_custom_call.1
$region0: #{tpu_custom_call.1}
  #allocation0 [shape = 'u32[]', space=smem, size = 0x4, offset = 0x4, fixed_abs, tag = 'smem constant byte address 0x4 - core index']
  #allocation1 [shape = 'u32[144,128]{1,0:T(1,128)}', space=vmem, size = 0x12000, scoped, tag = 'internal scratch']
  %s0 = inlined_call_operand.hbm [shape: f32[1,2048], index: 0, kind: input, shape index: {}]
  %s1 = inlined_call_operand.hbm [shape: f32[1,2048], index: 1, kind: output, shape index: {}]
  %s2 = sld [smem:[#allocation0]]
  $region18: #{tpu_custom_call.1} parent=0
    _
  %s4 = ssub.s32 1, %s2
  %s5 = scalar_select 0, %s4, %s2
  $region1: #{tpu_custom_call.1} parent=0
    #allocation2 [shape = 'u8[8192]{0}', space=vmem, size = 0x2000, scoped, tag = 'input window, operand 0, single buffered']
    #allocation3 [shape = 's32[1]{0}', space=sflag, size = 0x4, scoped, tag = 'scoped memory for tpu_custom_call.1']
    #allocation4 [shape = 's32[1]{0}', space=sflag, size = 0x4, scoped, tag = 'scoped memory for tpu_custom_call.1']
    #allocation5 [shape = 'u8[8192]{0}', space=vmem, size = 0x2000, scoped, tag = 'output window, operand 0, single buffered']
    %6 = vsyncpa [#allocation3], 0
    %7 = vsyncpa [#allocation4], 0
    // Predicated region
    $region2: #{tpu_custom_call.1} parent=1 // pred_check
      _
    $region3: #{tpu_custom_call.1} parent=1 // pred_check_branch
      %9 = sbr.rel (0) target = $region5
    $region4: #{tpu_custom_call.1} parent=1 // pred_region
      %s11 = ssub.s32 256, 256
      %12 = vsyncadd [#allocation3], %s11
      %s14 = sshll.u32 [#allocation2], 4
      %s15 = int_to_ptr.vmem [resolvable:$true] %s14
      %17 = dma.hbm_to_vmem [thread:$0]  %s0, 256, %s15, [#allocation3]
    $region5: #{tpu_custom_call.1} parent=1 // pred_fallthru
      _
    // Predicated region
    $region6: #{tpu_custom_call.1} parent=1 // pred_check
      _
    $region7: #{tpu_custom_call.1} parent=1 // pred_check_branch
      %19 = sbr.rel (0) target = $region9
    $region8: #{tpu_custom_call.1} parent=1 // pred_region
      %20 = dma.done [#allocation3], 256
    $region9: #{tpu_custom_call.1} parent=1 // pred_fallthru
      _
    %v21 = vld [vmem:[#allocation2] sm:$0xff]
    %v22 = vld [vmem:[#allocation2 + $0x8] sm:$0xff]
    %v23 = vxor.u32 %v21, 2147483648
    %v24 = vxor.u32 %v22, 2147483648
    %v25 = vmul.f32 %v23, 1.442695
    %v26 = vpow.pop %v25
    %v27 = vmul.f32 %v24, 1.442695
    %v28 = vpow.pop %v27
    %v29 = vadd.f32 %v26, 1.0
    %v30 = vadd.f32 %v28, 1.0
    %v31 = vrcp.pop %v29
    %v32 = vmul.f32 1.0, %v31
    %v33 = vrcp.pop %v30
    %v34 = vmul.f32 1.0, %v33
    %35 = vst [vmem:[#allocation5] sm:$0xff] %v32
    %36 = vst [vmem:[#allocation5 + $0x8] sm:$0xff] %v34
    // Predicated region
    $region10: #{tpu_custom_call.1} parent=1 // pred_check
      _
    $region11: #{tpu_custom_call.1} parent=1 // pred_check_branch
      %38 = sbr.rel (0) target = $region13
    $region12: #{tpu_custom_call.1} parent=1 // pred_region
      %s40 = ssub.s32 256, 256
      %41 = vsyncadd [#allocation4], %s40
      %s43 = sshll.u32 [#allocation5], 4
      %s44 = int_to_ptr.vmem [resolvable:$true] %s43
      %46 = dma.vmem_to_hbm [thread:$0]  %s44, 256, %s1, [#allocation4]
    $region13: #{tpu_custom_call.1} parent=1 // pred_fallthru
      _
    // Predicated region
    $region14: #{tpu_custom_call.1} parent=1 // pred_check
      _
    $region15: #{tpu_custom_call.1} parent=1 // pred_check_branch
      %48 = sbr.rel (0) target = $region17
    $region16: #{tpu_custom_call.1} parent=1 // pred_region
      %49 = dma.done [#allocation4], 256
    $region17: #{tpu_custom_call.1} parent=1 // pred_fallthru
      _
    %50 = vsyncpa [#allocation3], 1
    %51 = vsyncpa [#allocation4], 1

</llo_original>
